<compile_context>
chip_gen: v6e
topology: v6e:2x2x1
jax: 0.10.0
libtpu: 0.0.40
codegen_flags: <defaults>
</compile_context>

<pallas_src>
import jax
import jax.numpy as jnp
import numpy as np
from jax.experimental import pallas as pl
from jax.experimental.pallas import tpu as pltpu


# ----------------------------------------------------------------------------
# Fused kernel: avgpool(x4) + Conv1d(1,1,3,pad=1,no bias) + 4x Linear + sigmoid
# ----------------------------------------------------------------------------
def _fused_kernel(wconv_ref, x1_ref, x2_ref, x3_ref, x4_ref, wt_ref, b_ref, o_ref):
    """
    wconv_ref : SMEM (3,)            Conv1d(1,1,3) weight taps.
    x*_ref    : VMEM (B, c_i, H*W)   flattened NCHW inputs.
    wt_ref    : VMEM (Csum, Ctot)    [W1^T | W2^T | W3^T | W4^T] concatenated.
    b_ref     : VMEM (1, Ctot)       [b1 | b2 | b3 | b4].
    o_ref     : VMEM (B, Ctot)       sigmoid attention slab (lane-dense output).
    """
    # ---- Stage 1: global average pool (f32 accumulate), one (B, c_i) per input.
    pools = [jnp.mean(x_ref[...].astype(jnp.float32), axis=-1)
             for x_ref in (x1_ref, x2_ref, x3_ref, x4_ref)]

    # ---- Stage 2: fold the k=3 channel conv into the head weights.
    # y = conv1d(x) over the channel axis is linear:  y = x @ K  with K
    # tridiagonal (zero padding -> no wraparound), so  z = y @ W^T = x @ (K @ W^T).
    # K is built from iota compares (VPU); the fold is one tiny MXU dot.
    csum = wt_ref.shape[0]
    row = jax.lax.broadcasted_iota(jnp.int32, (csum, csum), 0)
    col = jax.lax.broadcasted_iota(jnp.int32, (csum, csum), 1)
    w0 = wconv_ref[0]
    w1 = wconv_ref[1]
    w2 = wconv_ref[2]
    k = (jnp.where(col == row + 1, w0, 0.0)      # x[j-1] taps
         + jnp.where(col == row, w1, 0.0)        # x[j]   taps
         + jnp.where(col == row - 1, w2, 0.0))   # x[j+1] taps
    m = jnp.dot(k, wt_ref[...].astype(jnp.float32),
                preferred_element_type=jnp.float32)            # (Csum, Ctot)

    # ---- Stage 3: single fused head matmul + bias + sigmoid.
    # x @ M is split per channel group so the pooled pieces are consumed
    # directly; row offsets (0/8/24/48) are sublane-aligned static slices.
    z = b_ref[...].astype(jnp.float32)                         # (1, Ctot)
    off = 0
    for p in pools:
        c = p.shape[1]
        z = z + jnp.dot(p, m[off:off + c, :], preferred_element_type=jnp.float32)
        off += c
    o_ref[...] = jax.nn.sigmoid(z).astype(o_ref.dtype)


# ----------------------------------------------------------------------------
# One-time parameter preparation (hoisted out of the forward, per review).
# ----------------------------------------------------------------------------
def prepare_params(params):
    """Pre-transpose & concatenate the four Linear heads: done once, not per call."""
    wt = jnp.concatenate([jnp.transpose(params[f"w{i}"]) for i in range(1, 5)],
                         axis=1)                                   # (Csum, Ctot)
    b = jnp.concatenate([params[f"b{i}"] for i in range(1, 5)])[None, :]  # (1, Ctot)
    return params["wconv"], wt, b


# ----------------------------------------------------------------------------
# Wrapper: full Channel_Att_Bridge forward (split_att='fc').
# ----------------------------------------------------------------------------
def channel_att_bridge(t1, t2, t3, t4, wconv, wt, b):
    ts = (t1, t2, t3, t4)
    B = t1.shape[0]
    ctot = wt.shape[1]

    # Glue: flatten spatial so the pool reduction runs over the lane axis.
    xs = [t.reshape(t.shape[0], t.shape[1], t.shape[2] * t.shape[3]) for t in ts]

    vmem = pl.BlockSpec(memory_space=pltpu.MemorySpace.VMEM)
    smem = pl.BlockSpec(memory_space=pltpu.MemorySpace.SMEM)

    # TODO(synk): for very large feature maps the untiled pool blocks would
    # exceed the scoped VMEM limit (esp. v7x @ 64 MiB physical); that regime
    # needs a gridded, pipelined pool stage. At bridge-attention sizes the four
    # inputs fit comfortably in one VMEM-resident fused kernel.
    att = pl.pallas_call(
        _fused_kernel,
        out_shape=jax.ShapeDtypeStruct((B, ctot), t1.dtype),
        in_specs=[smem, vmem, vmem, vmem, vmem, vmem, vmem],
        out_specs=vmem,
    )(wconv, *xs, wt, b)

    # Module interface: att_i.transpose(-1,-2).unsqueeze(-1).expand_as(t_i).
    # Pure broadcast glue (a view in torch); under jit it fuses with the
    # consumer, so no full-size redundant HBM write originates in the kernel.
    outs = []
    off = 0
    for t in ts:
        c = t.shape[1]
        a = att[:, off:off + c]
        outs.append(jnp.broadcast_to(a[:, :, None, None], t.shape))
        off += c
    return tuple(outs)


# ----------------------------------------------------------------------------
# Deterministic parameter init (shapes match the torch module's __init__).
# ----------------------------------------------------------------------------
def init_params(c_list, key):
    csum = sum(c_list) - c_list[-1]
    keys = jax.random.split(key, 9)
    params = {
        # nn.Conv1d(1, 1, 3, padding=1, bias=False).weight has shape (1,1,3)
        "wconv": 0.5 * jax.random.normal(keys[0], (3,), jnp.float32),
    }
    bound = 1.0 / np.sqrt(csum)
    for i in range(4):
        params[f"w{i + 1}"] = jax.random.uniform(
            keys[1 + 2 * i], (c_list[i], csum), jnp.float32, -bound, bound)
        params[f"b{i + 1}"] = jax.random.uniform(
            keys[2 + 2 * i], (c_list[i],), jnp.float32, -bound, bound)
    return params


# ----------------------------------------------------------------------------
# Pure-JAX reference (mirrors the PyTorch forward) for a correctness check.
# ----------------------------------------------------------------------------
def reference(t1, t2, t3, t4, params):
    ts = (t1, t2, t3, t4)
    pooled = jnp.concatenate([t.mean(axis=(2, 3)) for t in ts], axis=1)
    xp = jnp.pad(pooled, ((0, 0), (1, 1)))
    w = params["wconv"]
    C = pooled.shape[1]
    y = w[0] * xp[:, 0:C] + w[1] * xp[:, 1:C + 1] + w[2] * xp[:, 2:C + 2]
    outs = []
    for i, t in enumerate(ts, start=1):
        a = jax.nn.sigmoid(y @ params[f"w{i}"].T + params[f"b{i}"])
        outs.append(jnp.broadcast_to(a[:, :, None, None], t.shape))
    return tuple(outs)


if __name__ == "__main__":
    key = jax.random.PRNGKey(0)
    # c_list[-1] is unused by the forward; csum = 8+16+24+32 = 80
    c_list = [8, 16, 24, 32, 48]

    kt, kp = jax.random.split(key)
    k1, k2, k3, k4 = jax.random.split(kt, 4)
    t1 = jax.random.normal(k1, (2, c_list[0], 16, 16), jnp.float32)
    t2 = jax.random.normal(k2, (2, c_list[1], 8, 8), jnp.float32)
    t3 = jax.random.normal(k3, (2, c_list[2], 4, 4), jnp.float32)
    t4 = jax.random.normal(k4, (2, c_list[3], 4, 4), jnp.float32)

    params = init_params(c_list, kp)
    wconv, wt, b = prepare_params(params)   # hoisted: done once, outside forward

    fwd = jax.jit(channel_att_bridge)
    outs = fwd(t1, t2, t3, t4, wconv, wt, b)
    outs = jax.block_until_ready(outs)

    refs = reference(t1, t2, t3, t4, params)
    for o, r in zip(outs, refs):
        np.testing.assert_allclose(np.asarray(o), np.asarray(r), rtol=1e-5, atol=1e-5)

    print("KERNEL_OK")
</pallas_src>

<mosaic_0001>
module attributes {stable_mosaic.version = 11 : i64} {
  func.func @_fused_kernel(%arg0: memref<3xf32, #tpu.memory_space<smem>>, %arg1: memref<2x8x256xf32, #tpu.memory_space<vmem>>, %arg2: memref<2x16x64xf32, #tpu.memory_space<vmem>>, %arg3: memref<2x24x16xf32, #tpu.memory_space<vmem>>, %arg4: memref<2x32x16xf32, #tpu.memory_space<vmem>>, %arg5: memref<80x80xf32, #tpu.memory_space<vmem>>, %arg6: memref<1x80xf32, #tpu.memory_space<vmem>>, %arg7: memref<2x80xf32, #tpu.memory_space<vmem>>) attributes {dimension_semantics = [], scalar_prefetch = 0 : i64, scratch_operands = 0 : i64, tpu.core_type = #tpu.core_type<tc>} {
    %c0 = arith.constant 0 : index
    %c0_0 = arith.constant 0 : index
    %c0_1 = arith.constant 0 : index
    %0 = vector.load %arg1[%c0, %c0_0, %c0_1] : memref<2x8x256xf32, #tpu.memory_space<vmem>>, vector<2x8x256xf32>
    %cst = arith.constant dense<0.000000e+00> : vector<2x8xf32>
    %1 = vector.multi_reduction <add>, %0, %cst [2] : vector<2x8x256xf32> to vector<2x8xf32>
    %cst_2 = arith.constant 2.560000e+02 : f32
    %2 = vector.broadcast %cst_2 : f32 to vector<2x8xf32>
    %3 = arith.divf %1, %2 : vector<2x8xf32>
    %c0_3 = arith.constant 0 : index
    %c0_4 = arith.constant 0 : index
    %c0_5 = arith.constant 0 : index
    %4 = vector.load %arg2[%c0_3, %c0_4, %c0_5] : memref<2x16x64xf32, #tpu.memory_space<vmem>>, vector<2x16x64xf32>
    %cst_6 = arith.constant dense<0.000000e+00> : vector<2x16xf32>
    %5 = vector.multi_reduction <add>, %4, %cst_6 [2] : vector<2x16x64xf32> to vector<2x16xf32>
    %cst_7 = arith.constant 6.400000e+01 : f32
    %6 = vector.broadcast %cst_7 : f32 to vector<2x16xf32>
    %7 = arith.divf %5, %6 : vector<2x16xf32>
    %c0_8 = arith.constant 0 : index
    %c0_9 = arith.constant 0 : index
    %c0_10 = arith.constant 0 : index
    %8 = vector.load %arg3[%c0_8, %c0_9, %c0_10] : memref<2x24x16xf32, #tpu.memory_space<vmem>>, vector<2x24x16xf32>
    %cst_11 = arith.constant dense<0.000000e+00> : vector<2x24xf32>
    %9 = vector.multi_reduction <add>, %8, %cst_11 [2] : vector<2x24x16xf32> to vector<2x24xf32>
    %cst_12 = arith.constant 1.600000e+01 : f32
    %10 = vector.broadcast %cst_12 : f32 to vector<2x24xf32>
    %11 = arith.divf %9, %10 : vector<2x24xf32>
    %c0_13 = arith.constant 0 : index
    %c0_14 = arith.constant 0 : index
    %c0_15 = arith.constant 0 : index
    %12 = vector.load %arg4[%c0_13, %c0_14, %c0_15] : memref<2x32x16xf32, #tpu.memory_space<vmem>>, vector<2x32x16xf32>
    %cst_16 = arith.constant dense<0.000000e+00> : vector<2x32xf32>
    %13 = vector.multi_reduction <add>, %12, %cst_16 [2] : vector<2x32x16xf32> to vector<2x32xf32>
    %cst_17 = arith.constant 1.600000e+01 : f32
    %14 = vector.broadcast %cst_17 : f32 to vector<2x32xf32>
    %15 = arith.divf %13, %14 : vector<2x32xf32>
    %16 = tpu.iota {dimensions = array<i32: 0>} : vector<80x80xi32>
    %17 = tpu.iota {dimensions = array<i32: 1>} : vector<80x80xi32>
    %c0_18 = arith.constant 0 : index
    %18 = memref.load %arg0[%c0_18] : memref<3xf32, #tpu.memory_space<smem>>
    %c1 = arith.constant 1 : index
    %19 = memref.load %arg0[%c1] : memref<3xf32, #tpu.memory_space<smem>>
    %c2 = arith.constant 2 : index
    %20 = memref.load %arg0[%c2] : memref<3xf32, #tpu.memory_space<smem>>
    %c1_i32 = arith.constant 1 : i32
    %21 = vector.broadcast %c1_i32 : i32 to vector<80x80xi32>
    %22 = arith.addi %16, %21 : vector<80x80xi32>
    %23 = arith.cmpi eq, %17, %22 : vector<80x80xi32>
    %cst_19 = arith.constant 0.000000e+00 : f32
    %24 = vector.broadcast %18 : f32 to vector<80x80xf32>
    %25 = vector.broadcast %cst_19 : f32 to vector<80x80xf32>
    %26 = arith.select %23, %24, %25 : vector<80x80xi1>, vector<80x80xf32>
    %27 = arith.cmpi eq, %17, %16 : vector<80x80xi32>
    %cst_20 = arith.constant 0.000000e+00 : f32
    %28 = vector.broadcast %19 : f32 to vector<80x80xf32>
    %29 = vector.broadcast %cst_20 : f32 to vector<80x80xf32>
    %30 = arith.select %27, %28, %29 : vector<80x80xi1>, vector<80x80xf32>
    %31 = arith.addf %26, %30 : vector<80x80xf32>
    %c1_i32_21 = arith.constant 1 : i32
    %32 = vector.broadcast %c1_i32_21 : i32 to vector<80x80xi32>
    %33 = arith.subi %16, %32 : vector<80x80xi32>
    %34 = arith.cmpi eq, %17, %33 : vector<80x80xi32>
    %cst_22 = arith.constant 0.000000e+00 : f32
    %35 = vector.broadcast %20 : f32 to vector<80x80xf32>
    %36 = vector.broadcast %cst_22 : f32 to vector<80x80xf32>
    %37 = arith.select %34, %35, %36 : vector<80x80xi1>, vector<80x80xf32>
    %38 = arith.addf %31, %37 : vector<80x80xf32>
    %c0_23 = arith.constant 0 : index
    %c0_24 = arith.constant 0 : index
    %39 = vector.load %arg5[%c0_23, %c0_24] : memref<80x80xf32, #tpu.memory_space<vmem>>, vector<80x80xf32>
    %cst_25 = arith.constant dense<0.000000e+00> : vector<80x80xf32>
    %40 = tpu.matmul %38, %39, %cst_25 {dimension_numbers = #tpu.dot_dimension_numbers<[1], [0], [0], [1], [0, 0, 1, 1], [], []>} : vector<80x80xf32>, vector<80x80xf32>, vector<80x80xf32> -> vector<80x80xf32>
    %c0_26 = arith.constant 0 : index
    %c0_27 = arith.constant 0 : index
    %41 = vector.load %arg6[%c0_26, %c0_27] : memref<1x80xf32, #tpu.memory_space<vmem>>, vector<1x80xf32>
    %42 = vector.extract_strided_slice %40 {offsets = [0, 0], sizes = [8, 80], strides = [1, 1]} : vector<80x80xf32> to vector<8x80xf32>
    %cst_28 = arith.constant dense<0.000000e+00> : vector<2x80xf32>
    %43 = tpu.matmul %3, %42, %cst_28 {dimension_numbers = #tpu.dot_dimension_numbers<[1], [0], [0], [1], [0, 0, 1, 1], [], []>} : vector<2x8xf32>, vector<8x80xf32>, vector<2x80xf32> -> vector<2x80xf32>
    %44 = vector.broadcast %41 : vector<1x80xf32> to vector<2x80xf32>
    %45 = arith.addf %44, %43 : vector<2x80xf32>
    %46 = vector.extract_strided_slice %40 {offsets = [8, 0], sizes = [16, 80], strides = [1, 1]} : vector<80x80xf32> to vector<16x80xf32>
    %cst_29 = arith.constant dense<0.000000e+00> : vector<2x80xf32>
    %47 = tpu.matmul %7, %46, %cst_29 {dimension_numbers = #tpu.dot_dimension_numbers<[1], [0], [0], [1], [0, 0, 1, 1], [], []>} : vector<2x16xf32>, vector<16x80xf32>, vector<2x80xf32> -> vector<2x80xf32>
    %48 = arith.addf %45, %47 : vector<2x80xf32>
    %49 = vector.extract_strided_slice %40 {offsets = [24, 0], sizes = [24, 80], strides = [1, 1]} : vector<80x80xf32> to vector<24x80xf32>
    %cst_30 = arith.constant dense<0.000000e+00> : vector<2x80xf32>
    %50 = tpu.matmul %11, %49, %cst_30 {dimension_numbers = #tpu.dot_dimension_numbers<[1], [0], [0], [1], [0, 0, 1, 1], [], []>} : vector<2x24xf32>, vector<24x80xf32>, vector<2x80xf32> -> vector<2x80xf32>
    %51 = arith.addf %48, %50 : vector<2x80xf32>
    %52 = vector.extract_strided_slice %40 {offsets = [48, 0], sizes = [32, 80], strides = [1, 1]} : vector<80x80xf32> to vector<32x80xf32>
    %cst_31 = arith.constant dense<0.000000e+00> : vector<2x80xf32>
    %53 = tpu.matmul %15, %52, %cst_31 {dimension_numbers = #tpu.dot_dimension_numbers<[1], [0], [0], [1], [0, 0, 1, 1], [], []>} : vector<2x32xf32>, vector<32x80xf32>, vector<2x80xf32> -> vector<2x80xf32>
    %54 = arith.addf %51, %53 : vector<2x80xf32>
    %55 = arith.negf %54 : vector<2x80xf32>
    %56 = math.exp %55 : vector<2x80xf32>
    %cst_32 = arith.constant 1.000000e+00 : f32
    %57 = vector.broadcast %cst_32 : f32 to vector<2x80xf32>
    %58 = arith.addf %57, %56 : vector<2x80xf32>
    %59 = arith.divf %57, %58 : vector<2x80xf32>
    %c0_33 = arith.constant 0 : index
    %c0_34 = arith.constant 0 : index
    %60 = vector.load %arg7[%c0_33, %c0_34] : memref<2x80xf32, #tpu.memory_space<vmem>>, vector<2x80xf32>
    tpu.vector_store %arg7[%c0_33, %c0_34], %59 {strides = array<i32>} : memref<2x80xf32, #tpu.memory_space<vmem>>, vector<2x80xf32>,
    return
  }
}

</mosaic_0001>

<llo_original>
// kernel: channel_att_bridge.1
$region0: #{channel_att_bridge.1}
  #allocation0 [shape = 'u32[]', space=smem, size = 0x4, offset = 0x4, fixed_abs, tag = 'smem constant byte address 0x4 - core index']
  #allocation1 [shape = 'u32[144,128]{1,0:T(1,128)}', space=vmem, size = 0x12000, scoped, tag = 'internal scratch']
  %s0 = inlined_call_operand.vmem [shape: f32[3], index: 0, kind: input, shape index: {}]
  %s1 = inlined_call_operand.vmem [shape: f32[2,8,256], index: 1, kind: input, shape index: {}]
  %s2 = inlined_call_operand.vmem [shape: f32[2,16,64], index: 2, kind: input, shape index: {}]
  %s3 = inlined_call_operand.vmem [shape: f32[2,24,16], index: 3, kind: input, shape index: {}]
  %s4 = inlined_call_operand.vmem [shape: f32[2,32,16], index: 4, kind: input, shape index: {}]
  %s5 = inlined_call_operand.vmem [shape: f32[80,80], index: 5, kind: input, shape index: {}]
  %s6 = inlined_call_operand.vmem [shape: f32[1,80], index: 6, kind: input, shape index: {}]
  %s7 = inlined_call_operand.vmem [shape: f32[2,80], index: 7, kind: output, shape index: {}]
  %s8 = sld [smem:[#allocation0]]
  $region42: #{channel_att_bridge.1} parent=0
    _
  %s10 = ssub.s32 1, %s8
  %s11 = scalar_select 0, %s10, %s8
  $region1: #{channel_att_bridge.1} parent=0
    #allocation2 [shape = 'u8[512]{0}', space=smem, size = 0x200, scoped, tag = 'input window, operand 0, single buffered']
    #allocation3 [shape = 's32[1]{0}', space=sflag, size = 0x4, scoped, tag = 'scoped memory for channel_att_bridge.1']
    %12 = vsyncpa [#allocation3], 0
    // Predicated region
    $region2: #{channel_att_bridge.1} parent=1 // pred_check
      _
    $region3: #{channel_att_bridge.1} parent=1 // pred_check_branch
      %14 = sbr.rel (0) target = $region5
    $region4: #{channel_att_bridge.1} parent=1 // pred_region
      %s16 = ssub.s32 16, 16
      %17 = vsyncadd [#allocation3], %s16
      %s19 = sshll.u32 %s0, 4
      %s20 = int_to_ptr.vmem [resolvable:$true] %s19
      %22 = dma.vmem_to_smem %s20, 16, [#allocation2], [#allocation3]
    $region5: #{channel_att_bridge.1} parent=1 // pred_fallthru
      _
    // Predicated region
    $region6: #{channel_att_bridge.1} parent=1 // pred_check
      _
    $region7: #{channel_att_bridge.1} parent=1 // pred_check_branch
      %24 = sbr.rel (0) target = $region9
    $region8: #{channel_att_bridge.1} parent=1 // pred_region
      _
    $region9: #{channel_att_bridge.1} parent=1 // pred_fallthru
      _
    // Predicated region
    $region10: #{channel_att_bridge.1} parent=1 // pred_check
      _
    $region11: #{channel_att_bridge.1} parent=1 // pred_check_branch
      %26 = sbr.rel (0) target = $region13
    $region12: #{channel_att_bridge.1} parent=1 // pred_region
      _
    $region13: #{channel_att_bridge.1} parent=1 // pred_fallthru
      _
    // Predicated region
    $region14: #{channel_att_bridge.1} parent=1 // pred_check
      _
    $region15: #{channel_att_bridge.1} parent=1 // pred_check_branch
      %28 = sbr.rel (0) target = $region17
    $region16: #{channel_att_bridge.1} parent=1 // pred_region
      _
    $region17: #{channel_att_bridge.1} parent=1 // pred_fallthru
      _
    // Predicated region
    $region18: #{channel_att_bridge.1} parent=1 // pred_check
      _
    $region19: #{channel_att_bridge.1} parent=1 // pred_check_branch
      %30 = sbr.rel (0) target = $region21
    $region20: #{channel_att_bridge.1} parent=1 // pred_region
      _
    $region21: #{channel_att_bridge.1} parent=1 // pred_fallthru
      _
    // Predicated region
    $region22: #{channel_att_bridge.1} parent=1 // pred_check
      _
    $region23: #{channel_att_bridge.1} parent=1 // pred_check_branch
      %32 = sbr.rel (0) target = $region25
    $region24: #{channel_att_bridge.1} parent=1 // pred_region
      _
    $region25: #{channel_att_bridge.1} parent=1 // pred_fallthru
      _
    // Predicated region
    $region26: #{channel_att_bridge.1} parent=1 // pred_check
      _
    $region27: #{channel_att_bridge.1} parent=1 // pred_check_branch
      %34 = sbr.rel (0) target = $region29
    $region28: #{channel_att_bridge.1} parent=1 // pred_region
      _
    $region29: #{channel_att_bridge.1} parent=1 // pred_fallthru
      _
    // Predicated region
    $region30: #{channel_att_bridge.1} parent=1 // pred_check
      _
    $region31: #{channel_att_bridge.1} parent=1 // pred_check_branch
      %36 = sbr.rel (0) target = $region33
    $region32: #{channel_att_bridge.1} parent=1 // pred_region
      %37 = dma.done [#allocation3], 16
    $region33: #{channel_att_bridge.1} parent=1 // pred_fallthru
      _
    %38 = sfence
    %v39 = vld [vmem:[%s1] sm:$0xff]
    %v40 = vld [vmem:[%s1 + $0x8] sm:$0xff]
    %v41 = vld [vmem:[%s1 + $0x10] sm:$0xff]
    %v42 = vld [vmem:[%s1 + $0x18] sm:$0xff]
    %v43 = vadd.f32 %v39, %v40
    %44 = vadd.xlane.f32.xlu0 %v43
    %v45 = vpop.xlane.xlu0 %44
    %v46 = vadd.f32 %v41, %v42
    %47 = vadd.xlane.f32.xlu0 %v46
    %v48 = vpop.xlane.xlu0 %47
    %v49 = vrcp.pop 256.0
    %v50 = vmul.f32 %v45, %v49
    %v51 = vmul.f32 %v48, %v49
    %v52 = vld [vmem:[%s2] sm:$0xff]
    %v53 = vld [vmem:[%s2 + $0x8] sm:$0xff]
    %v54 = vld [vmem:[%s2 + $0x10] sm:$0xff]
    %v55 = vld [vmem:[%s2 + $0x18] sm:$0xff]
    %vm56 = vcmask 523264
    %v57 = vsel %vm56, %v52, 0.0
    %58 = vadd.xlane.f32.xlu0 %v57
    %v59 = vpop.xlane.xlu0 %58
    %v60 = vsel %vm56, %v53, 0.0
    %61 = vadd.xlane.f32.xlu0 %v60
    %v62 = vpop.xlane.xlu0 %61
    %v63 = vsel %vm56, %v54, 0.0
    %64 = vadd.xlane.f32.xlu0 %v63
    %v65 = vpop.xlane.xlu0 %64
    %v66 = vsel %vm56, %v55, 0.0
    %67 = vadd.xlane.f32.xlu0 %v66
    %v68 = vpop.xlane.xlu0 %67
    %v69 = vrcp.pop 64.0
    %v70 = vmul.f32 %v59, %v69
    %v71 = vmul.f32 %v62, %v69
    %v72 = vmul.f32 %v65, %v69
    %v73 = vmul.f32 %v68, %v69
    %v74 = vld [vmem:[%s3] sm:$0xff]
    %v75 = vld [vmem:[%s3 + $0x8] sm:$0xff]
    %v76 = vld [vmem:[%s3 + $0x10] sm:$0xff]
    %v77 = vld [vmem:[%s3 + $0x18] sm:$0xff]
    %v78 = vld [vmem:[%s3 + $0x20] sm:$0xff]
    %v79 = vld [vmem:[%s3 + $0x28] sm:$0xff]
    %vm80 = vcmask 130048
    %v81 = vsel %vm80, %v74, 0.0
    %82 = vadd.xlane.f32.xlu0 %v81
    %v83 = vpop.xlane.xlu0 %82
    %v84 = vsel %vm80, %v75, 0.0
    %85 = vadd.xlane.f32.xlu0 %v84
    %v86 = vpop.xlane.xlu0 %85
    %v87 = vsel %vm80, %v76, 0.0
    %88 = vadd.xlane.f32.xlu0 %v87
    %v89 = vpop.xlane.xlu0 %88
    %v90 = vsel %vm80, %v77, 0.0
    %91 = vadd.xlane.f32.xlu0 %v90
    %v92 = vpop.xlane.xlu0 %91
    %v93 = vsel %vm80, %v78, 0.0
    %94 = vadd.xlane.f32.xlu0 %v93
    %v95 = vpop.xlane.xlu0 %94
    %v96 = vsel %vm80, %v79, 0.0
    %97 = vadd.xlane.f32.xlu0 %v96
    %v98 = vpop.xlane.xlu0 %97
    %v99 = vrcp.pop 16.0
    %v100 = vmul.f32 %v83, %v99
    %v101 = vmul.f32 %v86, %v99
    %v102 = vmul.f32 %v89, %v99
    %v103 = vmul.f32 %v92, %v99
    %v104 = vmul.f32 %v95, %v99
    %v105 = vmul.f32 %v98, %v99
    %v106 = vld [vmem:[%s4] sm:$0xff]
    %v107 = vld [vmem:[%s4 + $0x8] sm:$0xff]
    %v108 = vld [vmem:[%s4 + $0x10] sm:$0xff]
    %v109 = vld [vmem:[%s4 + $0x18] sm:$0xff]
    %v110 = vld [vmem:[%s4 + $0x20] sm:$0xff]
    %v111 = vld [vmem:[%s4 + $0x28] sm:$0xff]
    %v112 = vld [vmem:[%s4 + $0x30] sm:$0xff]
    %v113 = vld [vmem:[%s4 + $0x38] sm:$0xff]
    %v114 = vsel %vm80, %v106, 0.0
    %115 = vadd.xlane.f32.xlu0 %v114
    %v116 = vpop.xlane.xlu0 %115
    %v117 = vsel %vm80, %v107, 0.0
    %118 = vadd.xlane.f32.xlu0 %v117
    %v119 = vpop.xlane.xlu0 %118
    %v120 = vsel %vm80, %v108, 0.0
    %121 = vadd.xlane.f32.xlu0 %v120
    %v122 = vpop.xlane.xlu0 %121
    %v123 = vsel %vm80, %v109, 0.0
    %124 = vadd.xlane.f32.xlu0 %v123
    %v125 = vpop.xlane.xlu0 %124
    %v126 = vsel %vm80, %v110, 0.0
    %127 = vadd.xlane.f32.xlu0 %v126
    %v128 = vpop.xlane.xlu0 %127
    %v129 = vsel %vm80, %v111, 0.0
    %130 = vadd.xlane.f32.xlu0 %v129
    %v131 = vpop.xlane.xlu0 %130
    %v132 = vsel %vm80, %v112, 0.0
    %133 = vadd.xlane.f32.xlu0 %v132
    %v134 = vpop.xlane.xlu0 %133
    %v135 = vsel %vm80, %v113, 0.0
    %136 = vadd.xlane.f32.xlu0 %v135
    %v137 = vpop.xlane.xlu0 %136
    %v138 = vmul.f32 %v116, %v99
    %v139 = vmul.f32 %v119, %v99
    %v140 = vmul.f32 %v122, %v99
    %v141 = vmul.f32 %v125, %v99
    %v142 = vmul.f32 %v128, %v99
    %v143 = vmul.f32 %v131, %v99
    %v144 = vmul.f32 %v134, %v99
    %v145 = vmul.f32 %v137, %v99
    %v146 = vlaneseq
    %v147 = vshrl.u32 %v146, 7
    %v148 = vadd.s32 %v147, 8
    %v149 = vadd.s32 %v147, 16
    %v150 = vadd.s32 %v147, 24
    %v151 = vadd.s32 %v147, 32
    %v152 = vadd.s32 %v147, 40
    %v153 = vadd.s32 %v147, 48
    %v154 = vadd.s32 %v147, 56
    %v155 = vadd.s32 %v147, 64
    %v156 = vadd.s32 %v147, 72
    %v157 = vlaneseq
    %v158 = vand.u32 %v157, 127
    %s159 = sld [smem:[#allocation2]]
    %s160 = sld [smem:[#allocation2 + $0x1]]
    %s161 = sld [smem:[#allocation2 + $0x2]]
    %v162 = vadd.s32 %v147, 1
    %v163 = vadd.s32 %v148, 1
    %v164 = vadd.s32 %v149, 1
    %v165 = vadd.s32 %v150, 1
    %v166 = vadd.s32 %v151, 1
    %v167 = vadd.s32 %v152, 1
    %v168 = vadd.s32 %v153, 1
    %v169 = vadd.s32 %v154, 1
    %v170 = vadd.s32 %v155, 1
    %v171 = vadd.s32 %v156, 1
    %vm172 = vcmp.eq.s32.totalorder %v158, %v162
    %vm173 = vcmp.eq.s32.totalorder %v158, %v163
    %vm174 = vcmp.eq.s32.totalorder %v158, %v164
    %vm175 = vcmp.eq.s32.totalorder %v158, %v165
    %vm176 = vcmp.eq.s32.totalorder %v158, %v166
    %vm177 = vcmp.eq.s32.totalorder %v158, %v167
    %vm178 = vcmp.eq.s32.totalorder %v158, %v168
    %vm179 = vcmp.eq.s32.totalorder %v158, %v169
    %vm180 = vcmp.eq.s32.totalorder %v158, %v170
    %vm181 = vcmp.eq.s32.totalorder %v158, %v171
    %v182 = vstv %s159
    %v183 = vsel %vm172, %v182, 0.0
    %v184 = vsel %vm173, %v182, 0.0
    %v185 = vsel %vm174, %v182, 0.0
    %v186 = vsel %vm175, %v182, 0.0
    %v187 = vsel %vm176, %v182, 0.0
    %v188 = vsel %vm177, %v182, 0.0
    %v189 = vsel %vm178, %v182, 0.0
    %v190 = vsel %vm179, %v182, 0.0
    %v191 = vsel %vm180, %v182, 0.0
    %v192 = vsel %vm181, %v182, 0.0
    %vm193 = vcmp.eq.s32.totalorder %v158, %v147
    %vm194 = vcmp.eq.s32.totalorder %v158, %v148
    %vm195 = vcmp.eq.s32.totalorder %v158, %v149
    %vm196 = vcmp.eq.s32.totalorder %v158, %v150
    %vm197 = vcmp.eq.s32.totalorder %v158, %v151
    %vm198 = vcmp.eq.s32.totalorder %v158, %v152
    %vm199 = vcmp.eq.s32.totalorder %v158, %v153
    %vm200 = vcmp.eq.s32.totalorder %v158, %v154
    %vm201 = vcmp.eq.s32.totalorder %v158, %v155
    %vm202 = vcmp.eq.s32.totalorder %v158, %v156
    %v203 = vstv %s160
    %v204 = vsel %vm193, %v203, 0.0
    %v205 = vsel %vm194, %v203, 0.0
    %v206 = vsel %vm195, %v203, 0.0
    %v207 = vsel %vm196, %v203, 0.0
    %v208 = vsel %vm197, %v203, 0.0
    %v209 = vsel %vm198, %v203, 0.0
    %v210 = vsel %vm199, %v203, 0.0
    %v211 = vsel %vm200, %v203, 0.0
    %v212 = vsel %vm201, %v203, 0.0
    %v213 = vsel %vm202, %v203, 0.0
    %v214 = vadd.f32 %v183, %v204
    %v215 = vadd.f32 %v184, %v205
    %v216 = vadd.f32 %v185, %v206
    %v217 = vadd.f32 %v186, %v207
    %v218 = vadd.f32 %v187, %v208
    %v219 = vadd.f32 %v188, %v209
    %v220 = vadd.f32 %v189, %v210
    %v221 = vadd.f32 %v190, %v211
    %v222 = vadd.f32 %v191, %v212
    %v223 = vadd.f32 %v192, %v213
    %v224 = vsub.s32 %v147, 1
    %v225 = vsub.s32 %v148, 1
    %v226 = vsub.s32 %v149, 1
    %v227 = vsub.s32 %v150, 1
    %v228 = vsub.s32 %v151, 1
    %v229 = vsub.s32 %v152, 1
    %v230 = vsub.s32 %v153, 1
    %v231 = vsub.s32 %v154, 1
    %v232 = vsub.s32 %v155, 1
    %v233 = vsub.s32 %v156, 1
    %vm234 = vcmp.eq.s32.totalorder %v158, %v224
    %vm235 = vcmp.eq.s32.totalorder %v158, %v225
    %vm236 = vcmp.eq.s32.totalorder %v158, %v226
    %vm237 = vcmp.eq.s32.totalorder %v158, %v227
    %vm238 = vcmp.eq.s32.totalorder %v158, %v228
    %vm239 = vcmp.eq.s32.totalorder %v158, %v229
    %vm240 = vcmp.eq.s32.totalorder %v158, %v230
    %vm241 = vcmp.eq.s32.totalorder %v158, %v231
    %vm242 = vcmp.eq.s32.totalorder %v158, %v232
    %vm243 = vcmp.eq.s32.totalorder %v158, %v233
    %v244 = vstv %s161
    %v245 = vsel %vm234, %v244, 0.0
    %v246 = vsel %vm235, %v244, 0.0
    %v247 = vsel %vm236, %v244, 0.0
    %v248 = vsel %vm237, %v244, 0.0
    %v249 = vsel %vm238, %v244, 0.0
    %v250 = vsel %vm239, %v244, 0.0
    %v251 = vsel %vm240, %v244, 0.0
    %v252 = vsel %vm241, %v244, 0.0
    %v253 = vsel %vm242, %v244, 0.0
    %v254 = vsel %vm243, %v244, 0.0
    %v255 = vadd.f32 %v214, %v245
    %v256 = vadd.f32 %v215, %v246
    %v257 = vadd.f32 %v216, %v247
    %v258 = vadd.f32 %v217, %v248
    %v259 = vadd.f32 %v218, %v249
    %v260 = vadd.f32 %v219, %v250
    %v261 = vadd.f32 %v220, %v251
    %v262 = vadd.f32 %v221, %v252
    %v263 = vadd.f32 %v222, %v253
    %v264 = vadd.f32 %v223, %v254
    %v265 = vld [vmem:[%s5] sm:$0xff]
    %v266 = vld [vmem:[%s5 + $0x8] sm:$0xff]
    %v267 = vld [vmem:[%s5 + $0x10] sm:$0xff]
    %v268 = vld [vmem:[%s5 + $0x18] sm:$0xff]
    %v269 = vld [vmem:[%s5 + $0x20] sm:$0xff]
    %v270 = vld [vmem:[%s5 + $0x28] sm:$0xff]
    %v271 = vld [vmem:[%s5 + $0x30] sm:$0xff]
    %v272 = vld [vmem:[%s5 + $0x38] sm:$0xff]
    %v273 = vld [vmem:[%s5 + $0x40] sm:$0xff]
    %v274 = vld [vmem:[%s5 + $0x48] sm:$0xff]
    %vm275 = vcmask 654336
    %v277 = vsel %vm275, %v255, 0
    %v280 = vsel %vm275, %v256, 0
    %v283 = vsel %vm275, %v257, 0
    %v286 = vsel %vm275, %v258, 0
    %v289 = vsel %vm275, %v259, 0
    %v292 = vsel %vm275, %v260, 0
    %v295 = vsel %vm275, %v261, 0
    %v298 = vsel %vm275, %v262, 0
    %v301 = vsel %vm275, %v263, 0
    %v304 = vsel %vm275, %v264, 0
    %306 = vmatprep.subr.mxu0 0.0
    %307 = vmatpush1.msra.mxu0 0.0
    %308 = vmatprep.subr.mxu0 0.0
    %309 = vmatpush1.msra.mxu0 0.0
    %310 = vmatprep.subr.mxu0 0.0
    %311 = vmatpush1.msra.mxu0 0.0
    %312 = vmatprep.subr.mxu0 0.0
    %313 = vmatpush1.msra.mxu0 0.0
    %314 = vmatprep.subr.mxu0 0.0
    %315 = vmatpush1.msra.mxu0 0.0
    %316 = vmatprep.subr.mxu0 0.0
    %317 = vmatpush1.msra.mxu0 0.0
    %318 = vmatprep.subr.mxu0 0.0
    %319 = vmatpush1.msra.mxu0 %v274
    %320 = vmatprep.subr.mxu0 0.0
    %321 = vmatpush1.msra.mxu0 %v273
    %322 = vmatprep.subr.mxu0 0.0
    %323 = vmatpush1.msra.mxu0 %v272
    %324 = vmatprep.subr.mxu0 0.0
    %325 = vmatpush1.msra.mxu0 %v271
    %326 = vmatprep.subr.mxu0 0.0
    %327 = vmatpush1.msra.mxu0 %v270
    %328 = vmatprep.subr.mxu0 0.0
    %329 = vmatpush1.msra.mxu0 %v269
    %330 = vmatprep.subr.mxu0 0.0
    %331 = vmatpush1.msra.mxu0 %v268
    %332 = vmatprep.subr.mxu0 0.0
    %333 = vmatpush1.msra.mxu0 %v267
    %334 = vmatprep.subr.mxu0 0.0
    %335 = vmatpush1.msra.mxu0 %v266
    %336 = vmatprep.subr.mxu0 0.0
    %337 = vmatpush1.msra.mxu0 %v265
    %338 = vmatprep.subr.mxu0 0.0
    %339 = vmatpush2.msra.mxu0 0.0
    %340 = vmatprep.subr.mxu0 0.0
    %341 = vmatpush2.msra.mxu0 0.0
    %342 = vmatprep.subr.mxu0 0.0
    %343 = vmatpush2.msra.mxu0 0.0
    %344 = vmatprep.subr.mxu0 0.0
    %345 = vmatpush2.msra.mxu0 0.0
    %346 = vmatprep.subr.mxu0 0.0
    %347 = vmatpush2.msra.mxu0 0.0
    %348 = vmatprep.subr.mxu0 0.0
    %349 = vmatpush2.msra.mxu0 0.0
    %350 = vmatprep.subr.mxu0 0.0
    %351 = vmatpush2.msra.mxu0 0.0
    %352 = vmatprep.subr.mxu0 0.0
    %353 = vmatpush2.msra.mxu0 0.0
    %354 = vmatprep.subr.mxu0 0.0
    %355 = vmatpush2.msra.mxu0 0.0
    %356 = vmatprep.subr.mxu0 0.0
    %357 = vmatpush2.msra.mxu0 0.0
    %358 = vmatprep.subr.mxu0 0.0
    %359 = vmatpush2.msra.mxu0 0.0
    %360 = vmatprep.subr.mxu0 0.0
    %361 = vmatpush2.msra.mxu0 0.0
    %362 = vmatprep.subr.mxu0 0.0
    %363 = vmatpush2.msra.mxu0 0.0
    %364 = vmatprep.subr.mxu0 0.0
    %365 = vmatpush2.msra.mxu0 0.0
    %366 = vmatprep.subr.mxu0 0.0
    %367 = vmatpush2.msra.mxu0 0.0
    %368 = vmatprep.subr.mxu0 0.0
    %369 = vmatpush2.msra.mxu0 0.0
    %370 = vmatprep.mubr.f32.mxu0 0.0
    %371 = vmatmul.mubr.f32.gmra.mxu0 %v277
    %v372 = vpop.f32.mrf.mxu0
    %v373 = vadd.f32 0.0, %v372
    %v374 = vpop.f32.mrf.mxu0
    %375 = vmatprep.mubr.f32.mxu0 0.0
    %376 = vmatmul.mubr.f32.gmra.mxu0 %v280
    %v377 = vpop.f32.mrf.mxu0
    %v378 = vadd.f32 0.0, %v377
    %v379 = vpop.f32.mrf.mxu0
    %380 = vmatprep.mubr.f32.mxu0 0.0
    %381 = vmatmul.mubr.f32.gmra.mxu0 %v283
    %v382 = vpop.f32.mrf.mxu0
    %v383 = vadd.f32 0.0, %v382
    %v384 = vpop.f32.mrf.mxu0
    %385 = vmatprep.mubr.f32.mxu0 0.0
    %386 = vmatmul.mubr.f32.gmra.mxu0 %v286
    %v387 = vpop.f32.mrf.mxu0
    %v388 = vadd.f32 0.0, %v387
    %v389 = vpop.f32.mrf.mxu0
    %390 = vmatprep.mubr.f32.mxu0 0.0
    %391 = vmatmul.mubr.f32.gmra.mxu0 %v289
    %v392 = vpop.f32.mrf.mxu0
    %v393 = vadd.f32 0.0, %v392
    %v394 = vpop.f32.mrf.mxu0
    %395 = vmatprep.mubr.f32.mxu0 0.0
    %396 = vmatmul.mubr.f32.gmra.mxu0 %v292
    %v397 = vpop.f32.mrf.mxu0
    %v398 = vadd.f32 0.0, %v397
    %v399 = vpop.f32.mrf.mxu0
    %400 = vmatprep.mubr.f32.mxu0 0.0
    %401 = vmatmul.mubr.f32.gmra.mxu0 %v295
    %v402 = vpop.f32.mrf.mxu0
    %v403 = vadd.f32 0.0, %v402
    %v404 = vpop.f32.mrf.mxu0
    %405 = vmatprep.mubr.f32.mxu0 0.0
    %406 = vmatmul.mubr.f32.gmra.mxu0 %v298
    %v407 = vpop.f32.mrf.mxu0
    %v408 = vadd.f32 0.0, %v407
    %v409 = vpop.f32.mrf.mxu0
    %410 = vmatprep.mubr.f32.mxu0 0.0
    %411 = vmatmul.mubr.f32.gmra.mxu0 %v301
    %v412 = vpop.f32.mrf.mxu0
    %v413 = vadd.f32 0.0, %v412
    %v414 = vpop.f32.mrf.mxu0
    %415 = vmatprep.mubr.f32.mxu0 0.0
    %416 = vmatmul.mubr.f32.gmra.mxu0 %v304
    %v417 = vpop.f32.mrf.mxu0
    %v418 = vadd.f32 0.0, %v417
    %v419 = vpop.f32.mrf.mxu0
    %420 = vdwg.mxu0
    %v421 = vld [vmem:[%s6] sm:$0x1]
    %v424 = vlaneseq
    %v425 = vshrl.u32 %v424, 7
    %v426 = vsub.s32 %v158, %v425
    %v427 = vrot.slane %v50, %v426
    %v428 = vlaneseq
    %v429 = vshrl.u32 %v428, 7
    %v430 = vsub.s32 %v158, %v429
    %v431 = vrot.slane %v51, %v430
    %vm432 = vcmask 1041409
    %v433 = vsel %vm432, %v431, %v427
    %vm434 = vcmask 64512
    %v435 = vsel %vm434, %v433, 0
    %437 = vmatprep.subr.mxu0 0.0
    %438 = vmatpush1.msra.mxu0 0.0
    %439 = vmatprep.subr.mxu0 0.0
    %440 = vmatpush1.msra.mxu0 0.0
    %441 = vmatprep.subr.mxu0 0.0
    %442 = vmatpush1.msra.mxu0 0.0
    %443 = vmatprep.subr.mxu0 0.0
    %444 = vmatpush1.msra.mxu0 0.0
    %445 = vmatprep.subr.mxu0 0.0
    %446 = vmatpush1.msra.mxu0 0.0
    %447 = vmatprep.subr.mxu0 0.0
    %448 = vmatpush1.msra.mxu0 0.0
    %449 = vmatprep.subr.mxu0 0.0
    %450 = vmatpush1.msra.mxu0 0.0
    %451 = vmatprep.subr.mxu0 0.0
    %452 = vmatpush1.msra.mxu0 0.0
    %453 = vmatprep.subr.mxu0 0.0
    %454 = vmatpush1.msra.mxu0 0.0
    %455 = vmatprep.subr.mxu0 0.0
    %456 = vmatpush1.msra.mxu0 0.0
    %457 = vmatprep.subr.mxu0 0.0
    %458 = vmatpush1.msra.mxu0 0.0
    %459 = vmatprep.subr.mxu0 0.0
    %460 = vmatpush1.msra.mxu0 0.0
    %461 = vmatprep.subr.mxu0 0.0
    %462 = vmatpush1.msra.mxu0 0.0
    %463 = vmatprep.subr.mxu0 0.0
    %464 = vmatpush1.msra.mxu0 0.0
    %465 = vmatprep.subr.mxu0 0.0
    %466 = vmatpush1.msra.mxu0 0.0
    %467 = vmatprep.subr.mxu0 0.0
    %468 = vmatpush1.msra.mxu0 %v373
    %469 = vmatprep.subr.mxu0 0.0
    %470 = vmatpush2.msra.mxu0 0.0
    %471 = vmatprep.subr.mxu0 0.0
    %472 = vmatpush2.msra.mxu0 0.0
    %473 = vmatprep.subr.mxu0 0.0
    %474 = vmatpush2.msra.mxu0 0.0
    %475 = vmatprep.subr.mxu0 0.0
    %476 = vmatpush2.msra.mxu0 0.0
    %477 = vmatprep.subr.mxu0 0.0
    %478 = vmatpush2.msra.mxu0 0.0
    %479 = vmatprep.subr.mxu0 0.0
    %480 = vmatpush2.msra.mxu0 0.0
    %481 = vmatprep.subr.mxu0 0.0
    %482 = vmatpush2.msra.mxu0 0.0
    %483 = vmatprep.subr.mxu0 0.0
    %484 = vmatpush2.msra.mxu0 0.0
    %485 = vmatprep.subr.mxu0 0.0
    %486 = vmatpush2.msra.mxu0 0.0
    %487 = vmatprep.subr.mxu0 0.0
    %488 = vmatpush2.msra.mxu0 0.0
    %489 = vmatprep.subr.mxu0 0.0
    %490 = vmatpush2.msra.mxu0 0.0
    %491 = vmatprep.subr.mxu0 0.0
    %492 = vmatpush2.msra.mxu0 0.0
    %493 = vmatprep.subr.mxu0 0.0
    %494 = vmatpush2.msra.mxu0 0.0
    %495 = vmatprep.subr.mxu0 0.0
    %496 = vmatpush2.msra.mxu0 0.0
    %497 = vmatprep.subr.mxu0 0.0
    %498 = vmatpush2.msra.mxu0 0.0
    %499 = vmatprep.subr.mxu0 0.0
    %500 = vmatpush2.msra.mxu0 0.0
    %501 = vmatprep.mubr.f32.mxu0 0.0
    %502 = vmatmul.mubr.f32.gmra.mxu0 %v435
    %v503 = vpop.f32.mrf.mxu0
    %v504 = vadd.f32 0.0, %v503
    %v505 = vpop.f32.mrf.mxu0
    %506 = vdwg.mxu0
    %v508 = vlaneseq
    %v509 = vshrl.u32 %v508, 7
    %v510 = vsub.s32 0, %v509
    %v511 = vrot.slane %v421, %v510
    %v513 = vadd.f32 %v511, %v504
    %v518 = vlaneseq
    %v519 = vshrl.u32 %v518, 7
    %v520 = vsub.s32 %v158, %v519
    %v521 = vrot.slane %v70, %v520
    %v522 = vadd.s32 %v158, 4294967288
    %v523 = vlaneseq
    %v524 = vshrl.u32 %v523, 7
    %v525 = vsub.s32 %v522, %v524
    %v526 = vrot.slane %v71, %v525
    %vm527 = vcmask 130112
    %v528 = vsel %vm527, %v526, %v521
    %v529 = vlaneseq
    %v530 = vshrl.u32 %v529, 7
    %v531 = vsub.s32 %v158, %v530
    %v532 = vrot.slane %v72, %v531
    %v533 = vlaneseq
    %v534 = vshrl.u32 %v533, 7
    %v535 = vsub.s32 %v522, %v534
    %v536 = vrot.slane %v73, %v535
    %v537 = vsel %vm527, %v536, %v532
    %v538 = vsel %vm432, %v537, %v528
    %v539 = vsel %vm80, %v538, 0
    %541 = vmatprep.subr.mxu0 0.0
    %542 = vmatpush1.msra.mxu0 0.0
    %543 = vmatprep.subr.mxu0 0.0
    %544 = vmatpush1.msra.mxu0 0.0
    %545 = vmatprep.subr.mxu0 0.0
    %546 = vmatpush1.msra.mxu0 0.0
    %547 = vmatprep.subr.mxu0 0.0
    %548 = vmatpush1.msra.mxu0 0.0
    %549 = vmatprep.subr.mxu0 0.0
    %550 = vmatpush1.msra.mxu0 0.0
    %551 = vmatprep.subr.mxu0 0.0
    %552 = vmatpush1.msra.mxu0 0.0
    %553 = vmatprep.subr.mxu0 0.0
    %554 = vmatpush1.msra.mxu0 0.0
    %555 = vmatprep.subr.mxu0 0.0
    %556 = vmatpush1.msra.mxu0 0.0
    %557 = vmatprep.subr.mxu0 0.0
    %558 = vmatpush1.msra.mxu0 0.0
    %559 = vmatprep.subr.mxu0 0.0
    %560 = vmatpush1.msra.mxu0 0.0
    %561 = vmatprep.subr.mxu0 0.0
    %562 = vmatpush1.msra.mxu0 0.0
    %563 = vmatprep.subr.mxu0 0.0
    %564 = vmatpush1.msra.mxu0 0.0
    %565 = vmatprep.subr.mxu0 0.0
    %566 = vmatpush1.msra.mxu0 0.0
    %567 = vmatprep.subr.mxu0 0.0
    %568 = vmatpush1.msra.mxu0 0.0
    %569 = vmatprep.subr.mxu0 0.0
    %570 = vmatpush1.msra.mxu0 %v383
    %571 = vmatprep.subr.mxu0 0.0
    %572 = vmatpush1.msra.mxu0 %v378
    %573 = vmatprep.subr.mxu0 0.0
    %574 = vmatpush2.msra.mxu0 0.0
    %575 = vmatprep.subr.mxu0 0.0
    %576 = vmatpush2.msra.mxu0 0.0
    %577 = vmatprep.subr.mxu0 0.0
    %578 = vmatpush2.msra.mxu0 0.0
    %579 = vmatprep.subr.mxu0 0.0
    %580 = vmatpush2.msra.mxu0 0.0
    %581 = vmatprep.subr.mxu0 0.0
    %582 = vmatpush2.msra.mxu0 0.0
    %583 = vmatprep.subr.mxu0 0.0
    %584 = vmatpush2.msra.mxu0 0.0
    %585 = vmatprep.subr.mxu0 0.0
    %586 = vmatpush2.msra.mxu0 0.0
    %587 = vmatprep.subr.mxu0 0.0
    %588 = vmatpush2.msra.mxu0 0.0
    %589 = vmatprep.subr.mxu0 0.0
    %590 = vmatpush2.msra.mxu0 0.0
    %591 = vmatprep.subr.mxu0 0.0
    %592 = vmatpush2.msra.mxu0 0.0
    %593 = vmatprep.subr.mxu0 0.0
    %594 = vmatpush2.msra.mxu0 0.0
    %595 = vmatprep.subr.mxu0 0.0
    %596 = vmatpush2.msra.mxu0 0.0
    %597 = vmatprep.subr.mxu0 0.0
    %598 = vmatpush2.msra.mxu0 0.0
    %599 = vmatprep.subr.mxu0 0.0
    %600 = vmatpush2.msra.mxu0 0.0
    %601 = vmatprep.subr.mxu0 0.0
    %602 = vmatpush2.msra.mxu0 0.0
    %603 = vmatprep.subr.mxu0 0.0
    %604 = vmatpush2.msra.mxu0 0.0
    %605 = vmatprep.mubr.f32.mxu0 0.0
    %606 = vmatmul.mubr.f32.gmra.mxu0 %v539
    %v607 = vpop.f32.mrf.mxu0
    %v608 = vadd.f32 0.0, %v607
    %v609 = vpop.f32.mrf.mxu0
    %610 = vdwg.mxu0
    %v611 = vadd.f32 %v513, %v608
    %v618 = vlaneseq
    %v619 = vshrl.u32 %v618, 7
    %v620 = vsub.s32 %v158, %v619
    %v621 = vrot.slane %v100, %v620
    %v622 = vlaneseq
    %v623 = vshrl.u32 %v622, 7
    %v624 = vsub.s32 %v522, %v623
    %v625 = vrot.slane %v101, %v624
    %v626 = vsel %vm527, %v625, %v621
    %v627 = vadd.s32 %v158, 4294967280
    %v628 = vlaneseq
    %v629 = vshrl.u32 %v628, 7
    %v630 = vsub.s32 %v627, %v629
    %v631 = vrot.slane %v102, %v630
    %vm632 = vcmask 195712
    %v633 = vsel %vm632, %v631, %v626
    %v634 = vlaneseq
    %v635 = vshrl.u32 %v634, 7
    %v636 = vsub.s32 %v158, %v635
    %v637 = vrot.slane %v103, %v636
    %v638 = vlaneseq
    %v639 = vshrl.u32 %v638, 7
    %v640 = vsub.s32 %v522, %v639
    %v641 = vrot.slane %v104, %v640
    %v642 = vsel %vm527, %v641, %v637
    %v643 = vlaneseq
    %v644 = vshrl.u32 %v643, 7
    %v645 = vsub.s32 %v627, %v644
    %v646 = vrot.slane %v105, %v645
    %v647 = vsel %vm632, %v646, %v642
    %v648 = vsel %vm432, %v647, %v633
    %vm649 = vcmask 195584
    %v650 = vsel %vm649, %v648, 0
    %652 = vmatprep.subr.mxu0 0.0
    %653 = vmatpush1.msra.mxu0 0.0
    %654 = vmatprep.subr.mxu0 0.0
    %655 = vmatpush1.msra.mxu0 0.0
    %656 = vmatprep.subr.mxu0 0.0
    %657 = vmatpush1.msra.mxu0 0.0
    %658 = vmatprep.subr.mxu0 0.0
    %659 = vmatpush1.msra.mxu0 0.0
    %660 = vmatprep.subr.mxu0 0.0
    %661 = vmatpush1.msra.mxu0 0.0
    %662 = vmatprep.subr.mxu0 0.0
    %663 = vmatpush1.msra.mxu0 0.0
    %664 = vmatprep.subr.mxu0 0.0
    %665 = vmatpush1.msra.mxu0 0.0
    %666 = vmatprep.subr.mxu0 0.0
    %667 = vmatpush1.msra.mxu0 0.0
    %668 = vmatprep.subr.mxu0 0.0
    %669 = vmatpush1.msra.mxu0 0.0
    %670 = vmatprep.subr.mxu0 0.0
    %671 = vmatpush1.msra.mxu0 0.0
    %672 = vmatprep.subr.mxu0 0.0
    %673 = vmatpush1.msra.mxu0 0.0
    %674 = vmatprep.subr.mxu0 0.0
    %675 = vmatpush1.msra.mxu0 0.0
    %676 = vmatprep.subr.mxu0 0.0
    %677 = vmatpush1.msra.mxu0 0.0
    %678 = vmatprep.subr.mxu0 0.0
    %679 = vmatpush1.msra.mxu0 %v398
    %680 = vmatprep.subr.mxu0 0.0
    %681 = vmatpush1.msra.mxu0 %v393
    %682 = vmatprep.subr.mxu0 0.0
    %683 = vmatpush1.msra.mxu0 %v388
    %684 = vmatprep.subr.mxu0 0.0
    %685 = vmatpush2.msra.mxu0 0.0
    %686 = vmatprep.subr.mxu0 0.0
    %687 = vmatpush2.msra.mxu0 0.0
    %688 = vmatprep.subr.mxu0 0.0
    %689 = vmatpush2.msra.mxu0 0.0
    %690 = vmatprep.subr.mxu0 0.0
    %691 = vmatpush2.msra.mxu0 0.0
    %692 = vmatprep.subr.mxu0 0.0
    %693 = vmatpush2.msra.mxu0 0.0
    %694 = vmatprep.subr.mxu0 0.0
    %695 = vmatpush2.msra.mxu0 0.0
    %696 = vmatprep.subr.mxu0 0.0
    %697 = vmatpush2.msra.mxu0 0.0
    %698 = vmatprep.subr.mxu0 0.0
    %699 = vmatpush2.msra.mxu0 0.0
    %700 = vmatprep.subr.mxu0 0.0
    %701 = vmatpush2.msra.mxu0 0.0
    %702 = vmatprep.subr.mxu0 0.0
    %703 = vmatpush2.msra.mxu0 0.0
    %704 = vmatprep.subr.mxu0 0.0
    %705 = vmatpush2.msra.mxu0 0.0
    %706 = vmatprep.subr.mxu0 0.0
    %707 = vmatpush2.msra.mxu0 0.0
    %708 = vmatprep.subr.mxu0 0.0
    %709 = vmatpush2.msra.mxu0 0.0
    %710 = vmatprep.subr.mxu0 0.0
    %711 = vmatpush2.msra.mxu0 0.0
    %712 = vmatprep.subr.mxu0 0.0
    %713 = vmatpush2.msra.mxu0 0.0
    %714 = vmatprep.subr.mxu0 0.0
    %715 = vmatpush2.msra.mxu0 0.0
    %716 = vmatprep.mubr.f32.mxu0 0.0
    %717 = vmatmul.mubr.f32.gmra.mxu0 %v650
    %v718 = vpop.f32.mrf.mxu0
    %v719 = vadd.f32 0.0, %v718
    %v720 = vpop.f32.mrf.mxu0
    %721 = vdwg.mxu0
    %v722 = vadd.f32 %v611, %v719
    %v731 = vlaneseq
    %v732 = vshrl.u32 %v731, 7
    %v733 = vsub.s32 %v158, %v732
    %v734 = vrot.slane %v138, %v733
    %v735 = vlaneseq
    %v736 = vshrl.u32 %v735, 7
    %v737 = vsub.s32 %v522, %v736
    %v738 = vrot.slane %v139, %v737
    %v739 = vsel %vm527, %v738, %v734
    %v740 = vlaneseq
    %v741 = vshrl.u32 %v740, 7
    %v742 = vsub.s32 %v627, %v741
    %v743 = vrot.slane %v140, %v742
    %v744 = vsel %vm632, %v743, %v739
    %v745 = vadd.s32 %v158, 4294967272
    %v746 = vlaneseq
    %v747 = vshrl.u32 %v746, 7
    %v748 = vsub.s32 %v745, %v747
    %v749 = vrot.slane %v141, %v748
    %vm750 = vcmask 261312
    %v751 = vsel %vm750, %v749, %v744
    %v752 = vlaneseq
    %v753 = vshrl.u32 %v752, 7
    %v754 = vsub.s32 %v158, %v753
    %v755 = vrot.slane %v142, %v754
    %v756 = vlaneseq
    %v757 = vshrl.u32 %v756, 7
    %v758 = vsub.s32 %v522, %v757
    %v759 = vrot.slane %v143, %v758
    %v760 = vsel %vm527, %v759, %v755
    %v761 = vlaneseq
    %v762 = vshrl.u32 %v761, 7
    %v763 = vsub.s32 %v627, %v762
    %v764 = vrot.slane %v144, %v763
    %v765 = vsel %vm632, %v764, %v760
    %v766 = vlaneseq
    %v767 = vshrl.u32 %v766, 7
    %v768 = vsub.s32 %v745, %v767
    %v769 = vrot.slane %v145, %v768
    %v770 = vsel %vm750, %v769, %v765
    %v771 = vsel %vm432, %v770, %v751
    %vm772 = vcmask 261120
    %v773 = vsel %vm772, %v771, 0
    %775 = vmatprep.subr.mxu0 0.0
    %776 = vmatpush1.msra.mxu0 0.0
    %777 = vmatprep.subr.mxu0 0.0
    %778 = vmatpush1.msra.mxu0 0.0
    %779 = vmatprep.subr.mxu0 0.0
    %780 = vmatpush1.msra.mxu0 0.0
    %781 = vmatprep.subr.mxu0 0.0
    %782 = vmatpush1.msra.mxu0 0.0
    %783 = vmatprep.subr.mxu0 0.0
    %784 = vmatpush1.msra.mxu0 0.0
    %785 = vmatprep.subr.mxu0 0.0
    %786 = vmatpush1.msra.mxu0 0.0
    %787 = vmatprep.subr.mxu0 0.0
    %788 = vmatpush1.msra.mxu0 0.0
    %789 = vmatprep.subr.mxu0 0.0
    %790 = vmatpush1.msra.mxu0 0.0
    %791 = vmatprep.subr.mxu0 0.0
    %792 = vmatpush1.msra.mxu0 0.0
    %793 = vmatprep.subr.mxu0 0.0
    %794 = vmatpush1.msra.mxu0 0.0
    %795 = vmatprep.subr.mxu0 0.0
    %796 = vmatpush1.msra.mxu0 0.0
    %797 = vmatprep.subr.mxu0 0.0
    %798 = vmatpush1.msra.mxu0 0.0
    %799 = vmatprep.subr.mxu0 0.0
    %800 = vmatpush1.msra.mxu0 %v418
    %801 = vmatprep.subr.mxu0 0.0
    %802 = vmatpush1.msra.mxu0 %v413
    %803 = vmatprep.subr.mxu0 0.0
    %804 = vmatpush1.msra.mxu0 %v408
    %805 = vmatprep.subr.mxu0 0.0
    %806 = vmatpush1.msra.mxu0 %v403
    %807 = vmatprep.subr.mxu0 0.0
    %808 = vmatpush2.msra.mxu0 0.0
    %809 = vmatprep.subr.mxu0 0.0
    %810 = vmatpush2.msra.mxu0 0.0
    %811 = vmatprep.subr.mxu0 0.0
    %812 = vmatpush2.msra.mxu0 0.0
    %813 = vmatprep.subr.mxu0 0.0
    %814 = vmatpush2.msra.mxu0 0.0
    %815 = vmatprep.subr.mxu0 0.0
    %816 = vmatpush2.msra.mxu0 0.0
    %817 = vmatprep.subr.mxu0 0.0
    %818 = vmatpush2.msra.mxu0 0.0
    %819 = vmatprep.subr.mxu0 0.0
    %820 = vmatpush2.msra.mxu0 0.0
    %821 = vmatprep.subr.mxu0 0.0
    %822 = vmatpush2.msra.mxu0 0.0
    %823 = vmatprep.subr.mxu0 0.0
    %824 = vmatpush2.msra.mxu0 0.0
    %825 = vmatprep.subr.mxu0 0.0
    %826 = vmatpush2.msra.mxu0 0.0
    %827 = vmatprep.subr.mxu0 0.0
    %828 = vmatpush2.msra.mxu0 0.0
    %829 = vmatprep.subr.mxu0 0.0
    %830 = vmatpush2.msra.mxu0 0.0
    %831 = vmatprep.subr.mxu0 0.0
    %832 = vmatpush2.msra.mxu0 0.0
    %833 = vmatprep.subr.mxu0 0.0
    %834 = vmatpush2.msra.mxu0 0.0
    %835 = vmatprep.subr.mxu0 0.0
    %836 = vmatpush2.msra.mxu0 0.0
    %837 = vmatprep.subr.mxu0 0.0
    %838 = vmatpush2.msra.mxu0 0.0
    %839 = vmatprep.mubr.f32.mxu0 0.0
    %840 = vmatmul.mubr.f32.gmra.mxu0 %v773
    %v841 = vpop.f32.mrf.mxu0
    %v842 = vadd.f32 0.0, %v841
    %v843 = vpop.f32.mrf.mxu0
    %844 = vdwg.mxu0
    %v845 = vadd.f32 %v722, %v842
    %v846 = vxor.u32 %v845, 2147483648
    %v847 = vmul.f32 %v846, 1.442695
    %v848 = vpow.pop %v847
    %v849 = vadd.f32 %v848, 1.0
    %v850 = vrcp.pop %v849
    %v851 = vmul.f32 1.0, %v850
    %vm852 = vcmask 648192
    %853 = vst.msk [vmem:[%s7] sm:$0x3] %vm852, %v851
    // Predicated region
    $region34: #{channel_att_bridge.1} parent=1 // pred_check
      _
    $region35: #{channel_att_bridge.1} parent=1 // pred_check_branch
      %855 = sbr.rel (0) target = $region37
    $region36: #{channel_att_bridge.1} parent=1 // pred_region
      _
    $region37: #{channel_att_bridge.1} parent=1 // pred_fallthru
      _
    // Predicated region
    $region38: #{channel_att_bridge.1} parent=1 // pred_check
      _
    $region39: #{channel_att_bridge.1} parent=1 // pred_check_branch
      %857 = sbr.rel (0) target = $region41
    $region40: #{channel_att_bridge.1} parent=1 // pred_region
      _
    $region41: #{channel_att_bridge.1} parent=1 // pred_fallthru
      _
    %858 = vsyncpa [#allocation3], 1

</llo_original>
